<compile_context>
chip_gen: v7x
topology: tpu7x:2x2x1
jax: 0.10.0
libtpu: 0.0.40
codegen_flags: <defaults>
</compile_context>

<pallas_src>
import functools

import numpy as np
import jax
import jax.numpy as jnp
from jax.experimental import pallas as pl
from jax.experimental.pallas import tpu as pltpu

_SQRT_HALF = 0.7071067811865476
_BN_EPS = 1e-5


# --------------------------------------------------------------------------
# In-kernel math helpers
# --------------------------------------------------------------------------
def _reciprocal(x, approx):
    if approx:
        return pl.reciprocal(x, approx=True)   # EUP slot, ~free
    return 1.0 / x


def _erf(x, approx):
    # Abramowitz & Stegun 7.1.26 polynomial erf (|err| < 1.5e-7 ~ f32 noise).
    # TODO(synk): lax.erf has no guaranteed Mosaic lowering; polynomial used.
    a1, a2, a3, a4, a5 = (0.254829592, -0.284496736, 1.421413741,
                          -1.453152027, 1.061405429)
    p = 0.3275911
    s = jnp.where(x >= 0.0, 1.0, -1.0)
    ax = jnp.abs(x)
    t = _reciprocal(1.0 + p * ax, approx)
    poly = ((((a5 * t + a4) * t + a3) * t + a2) * t + a1) * t
    return s * (1.0 - poly * jnp.exp(-ax * ax))


def _gelu_exact(x, approx):
    # PyTorch F.gelu default (erf-based, approximate='none').  All math f32.
    return 0.5 * x * (1.0 + _erf(x * _SQRT_HALF, approx))


def _sigmoid(x, approx):
    return _reciprocal(1.0 + jnp.exp(-x), approx)


def _fill_padded(pad_ref, vals, *, k, dil):
    """Store vals (bt,T,C) into the interior of the zero-halo scratch buffer.
    Halo rows are re-zeroed every step (cheap: <= dil*(k-1) rows) so the
    kernel is self-contained per grid step (safe under megacore 'parallel')."""
    bt, T, cp = vals.shape
    total = dil * (k - 1)
    lo = total // 2
    hi = total - lo
    if lo:
        pad_ref[:, :lo, :] = jnp.zeros((bt, lo, cp), pad_ref.dtype)
    if hi:
        pad_ref[:, lo + T:, :] = jnp.zeros((bt, hi, cp), pad_ref.dtype)
    pad_ref[:, lo:lo + T, :] = vals


def _conv_from_padded(pad_ref, w_ref, b_ref, *, k, dil, T):
    """Dilated 'same' conv as k accumulating MXU matmuls over static tap
    slices of the padded scratch.  Returns (bt*T, Cout) f32."""
    bt = pad_ref.shape[0]
    cp = pad_ref.shape[2]
    rows = bt * T
    acc = None
    for j in range(k):
        tap = pad_ref[:, j * dil:j * dil + T, :].reshape(rows, cp)
        c = jnp.dot(tap, w_ref[j], preferred_element_type=jnp.float32)
        acc = c if acc is None else acc + c
    return acc + b_ref[...]


def _store_channel_stats(st_ref, h_rows_f32):
    # Per-channel partial (sum, sum-of-squares) for this tile, single store.
    s1 = jnp.sum(h_rows_f32, axis=0, keepdims=True)
    s2 = jnp.sum(h_rows_f32 * h_rows_f32, axis=0, keepdims=True)
    st_ref[0] = jnp.concatenate([s1, s2], axis=0)


# --------------------------------------------------------------------------
# Stage kernels (grid = batch tiles)
# --------------------------------------------------------------------------
def _stage1_kernel(x_ref, w_ref, b_ref, h_ref, st_ref, pad_ref, *, k, dil):
    # conv1 + input residual; stats of the value actually written (rounded).
    x = x_ref[...].astype(jnp.float32)                    # (bt, T, Cp)
    bt, T, _ = x.shape
    _fill_padded(pad_ref, x.astype(pad_ref.dtype), k=k, dil=dil)
    conv = _conv_from_padded(pad_ref, w_ref, b_ref, k=k, dil=dil, T=T)
    h = conv.reshape(bt, T, -1) + x
    hr = h.astype(h_ref.dtype)
    h_ref[...] = hr
    _store_channel_stats(st_ref, hr.astype(jnp.float32).reshape(bt * T, -1))


def _stage2_kernel(h_ref, w_ref, b_ref, sc_ref, sh_ref, h2_ref, st_ref,
                   pad_ref, *, k, dil, approx):
    # bn2 (folded affine) + gelu + conv2 + residual; fresh stats for reused bn2.
    h = h_ref[...].astype(jnp.float32)                    # (bt, T, Cp)
    bt, T, _ = h.shape
    g = _gelu_exact(h * sc_ref[...] + sh_ref[...], approx)
    _fill_padded(pad_ref, g.astype(pad_ref.dtype), k=k, dil=dil)
    conv = _conv_from_padded(pad_ref, w_ref, b_ref, k=k, dil=dil, T=T)
    h2 = conv.reshape(bt, T, -1) + g
    h2r = h2.astype(h2_ref.dtype)
    h2_ref[...] = h2r
    _store_channel_stats(st_ref, h2r.astype(jnp.float32).reshape(bt * T, -1))


def _stage3_split_kernel(h_ref, wa_ref, wg_ref, ba_ref, bg_ref, sc_ref,
                         sh_ref, o_ref, pad_ref, *, k, dil, approx):
    # bn2 (fresh stats) + gelu + conv3 (pre-split halves) + GLU over channels.
    h = h_ref[...].astype(jnp.float32)
    bt, T, _ = h.shape
    g = _gelu_exact(h * sc_ref[...] + sh_ref[...], approx)
    _fill_padded(pad_ref, g.astype(pad_ref.dtype), k=k, dil=dil)
    a = _conv_from_padded(pad_ref, wa_ref, ba_ref, k=k, dil=dil, T=T)
    gt = _conv_from_padded(pad_ref, wg_ref, bg_ref, k=k, dil=dil, T=T)
    o = a * _sigmoid(gt, approx)
    o_ref[...] = o.reshape(bt, T, -1).astype(o_ref.dtype)


def _stage3_fused_kernel(h_ref, w_ref, b_ref, sc_ref, sh_ref, o_ref, pad_ref,
                         *, k, dil, approx, half):
    # Same as above, but a/gate fused into one matmul; `half` is a multiple of
    # 128 so the result split is a free lane-tile-aligned slice.
    h = h_ref[...].astype(jnp.float32)
    bt, T, _ = h.shape
    g = _gelu_exact(h * sc_ref[...] + sh_ref[...], approx)
    _fill_padded(pad_ref, g.astype(pad_ref.dtype), k=k, dil=dil)
    y = _conv_from_padded(pad_ref, w_ref, b_ref, k=k, dil=dil, T=T)
    o = y[:, :half] * _sigmoid(y[:, half:], approx)
    o_ref[...] = o.reshape(bt, T, half).astype(o_ref.dtype)


# --------------------------------------------------------------------------
# Trace-time packing / tiling helpers
# --------------------------------------------------------------------------
def _round_up(n, m):
    return ((n + m - 1) // m) * m


def _lane_pad(c):
    # Lane-dense (unmasked vst) when the byte overhead is acceptable; tiny
    # channel counts are left as-is (padding 8 -> 128 would 16x HBM traffic).
    return _round_up(c, 128) if c > 64 else c


def _pad_weight(w, cin_p, cout_p):
    k, cin, cout = w.shape
    w = w.astype(jnp.float32)
    if cin == cin_p and cout == cout_p:
        return w
    return jnp.zeros((k, cin_p, cout_p), jnp.float32).at[:, :cin, :cout].set(w)


def _pad_bias(b, n):
    b = b.reshape(1, -1).astype(jnp.float32)
    if b.shape[1] == n:
        return b
    return jnp.zeros((1, n), jnp.float32).at[:, :b.shape[1]].set(b)


def _pad_vec(v, n):
    v = v.reshape(-1).astype(jnp.float32)
    if v.shape[0] == n:
        return v
    return jnp.zeros((n,), jnp.float32).at[:v.shape[0]].set(v)


def _default_vmem_limit():
    """Scoped VMEM limit: ~5/8 of physical VMEM (v7x has 64 MiB/TC vs 128 MiB
    on v5e/v6e), leaving headroom for Mosaic internal scratch."""
    cap = None
    try:
        cap = pltpu.get_tpu_info().vmem_capacity_bytes
    except Exception:
        cap = None
    if not cap:
        cap = 64 * 1024 * 1024            # assume the smallest (v7x) part
    return int(min(max(cap * 5 // 8, 32 * 1024 * 1024), 96 * 1024 * 1024))


def _step_footprint_bytes(bt, T, c_act, halo, act_bytes, cdt_bytes):
    # Rough per-step working set: double-buffered in/out activation blocks,
    # the padded-tap scratch (matmul dtype) and a few f32 temporaries.
    return bt * (T * c_act * (4 * act_bytes + 16)
                 + (T + halo) * c_act * cdt_bytes)


def _pick_batch_tile(B, T, c_act, halo, act_bytes, cdt_bytes, budget_bytes):
    """Largest divisor of B whose per-step working set fits `budget_bytes`,
    preferring >= 4 grid steps (both v7x TensorCores get >= 2 pipelined
    steps), then >= 2, then whatever fits.  Prefers bt*T % 8 == 0."""
    divisors = [d for d in range(1, B + 1) if B % d == 0]
    fits = [d for d in divisors
            if _step_footprint_bytes(d, T, c_act, halo, act_bytes,
                                     cdt_bytes) <= budget_bytes] or [1]
    for min_steps in (4, 2, 1):
        cand = [d for d in fits if B // d >= min_steps]
        if cand:
            aligned = [d for d in cand if (d * T) % 8 == 0]
            return max(aligned if aligned else cand)
    return 1


# --------------------------------------------------------------------------
# Wrapper
# --------------------------------------------------------------------------
def conv1d_block_forward(x, params, kernel_sizes, dilation_rates, *,
                         matmul_dtype=jnp.bfloat16, act_dtype=None,
                         batch_tile=None, vmem_limit_bytes=None):
    x = x.astype(jnp.float32)
    B, T, Cin = x.shape
    w1, b1 = params["w1"], params["b1"]
    w2, b2 = params["w2"], params["b2"]
    w3, b3 = params["w3"], params["b3"]
    gamma2 = params["gamma2"]
    beta2 = params["beta2"]
    k0, k1, k2 = kernel_sizes
    d0, d1, d2 = dilation_rates
    C0, C1, C2 = w1.shape[2], w2.shape[2], w3.shape[2]
    # Residual adds + shared bn2 require these to hold (as in the torch module).
    assert C0 == Cin and C1 == C0 and C2 % 2 == 0
    C2h = C2 // 2

    cdt = jnp.dtype(matmul_dtype)
    adt = jnp.dtype(act_dtype) if act_dtype is not None else cdt
    # Approximate EUP reciprocal only in the bf16 perf mode; the f32 mode
    # reproduces PyTorch f32 numerics (elementwise math is always f32).
    approx = cdt == jnp.dtype(jnp.bfloat16)

    # ---- trace-time packing (lane-dense channel padding where worthwhile) --
    Cp = _lane_pad(Cin)                 # activation / residual channel width
    C2hp = _lane_pad(C2h)               # GLU half width
    fuse_glu = (C2hp % 128 == 0)

    w1p = _pad_weight(w1, Cp, Cp).astype(cdt)
    w2p = _pad_weight(w2, Cp, Cp).astype(cdt)
    b1p = _pad_bias(b1, Cp)
    b2p = _pad_bias(b2, Cp)
    gamma2p = _pad_vec(gamma2, Cp)       # zero-padded -> padded channels stay 0
    beta2p = _pad_vec(beta2, Cp)

    w3a = _pad_weight(w3[:, :, :C2h], Cp, C2hp)
    w3g = _pad_weight(w3[:, :, C2h:], Cp, C2hp)
    b3a = _pad_bias(b3[:C2h], C2hp)
    b3g = _pad_bias(b3[C2h:], C2hp)
    if fuse_glu:
        w3p = jnp.concatenate([w3a, w3g], axis=2).astype(cdt)
        b3p = jnp.concatenate([b3a, b3g], axis=1)
    else:
        w3a = w3a.astype(cdt)
        w3g = w3g.astype(cdt)

    xp = x if Cp == Cin else jnp.pad(x, ((0, 0), (0, 0), (0, Cp - Cin)))

    # ---- tiling -------------------------------------------------------------
    vmem_limit = (vmem_limit_bytes if vmem_limit_bytes is not None
                  else _default_vmem_limit())
    budget = vmem_limit // 3
    halo = max(d * (k - 1) for k, d in zip(kernel_sizes, dilation_rates))
    c_act = max(Cp, 2 * C2hp)
    act_bytes = jnp.dtype(adt).itemsize
    cdt_bytes = jnp.dtype(cdt).itemsize
    bt = _pick_batch_tile(B, T, c_act, halo, act_bytes, cdt_bytes, budget)
    if (batch_tile is not None and B % batch_tile == 0 and
            _step_footprint_bytes(batch_tile, T, c_act, halo, act_bytes,
                                  cdt_bytes) <= budget):
        bt = batch_tile
    assert B % bt == 0
    nb = B // bt

    cp_params = pltpu.CompilerParams(
        dimension_semantics=("parallel",),        # megacore sharding on v7x
        vmem_limit_bytes=vmem_limit)

    def row_spec(c):
        return pl.BlockSpec((bt, T, c), lambda i: (i, 0, 0))

    def full_spec(arr):
        return pl.BlockSpec(arr.shape, lambda i: (0,) * arr.ndim)

    def stats_spec(c):
        return pl.BlockSpec((1, 2, c), lambda i: (i, 0, 0))

    def pad_scratch(k, dil):
        return pltpu.VMEM((bt, T + dil * (k - 1), Cp), cdt)

    n_rows = float(B * T)

    def bn_affine(stats):
        # Fold train-mode BatchNorm (biased variance) into a per-channel affine.
        s = jnp.sum(stats, axis=0)                       # (2, Cp)
        mean = s[0] / n_rows
        var = jnp.maximum(s[1] / n_rows - mean * mean, 0.0)
        scale = gamma2p * jax.lax.rsqrt(var + _BN_EPS)
        shift = beta2p - mean * scale
        return (scale.reshape(1, -1).astype(jnp.float32),
                shift.reshape(1, -1).astype(jnp.float32))

    # Stage 1: conv1 + input residual (+ BN partial stats on stored value).
    h1, st1 = pl.pallas_call(
        functools.partial(_stage1_kernel, k=k0, dil=d0),
        grid=(nb,),
        in_specs=[row_spec(Cp), full_spec(w1p), full_spec(b1p)],
        out_specs=(row_spec(Cp), stats_spec(Cp)),
        out_shape=(jax.ShapeDtypeStruct((B, T, Cp), adt),
                   jax.ShapeDtypeStruct((nb, 2, Cp), jnp.float32)),
        scratch_shapes=[pad_scratch(k0, d0)],
        compiler_params=cp_params,
    )(xp, w1p, b1p)
    sc1, sh1 = bn_affine(st1)

    # Stage 2: bn2 + gelu + conv2 + residual (+ fresh BN partial stats).
    h2, st2 = pl.pallas_call(
        functools.partial(_stage2_kernel, k=k1, dil=d1, approx=approx),
        grid=(nb,),
        in_specs=[row_spec(Cp), full_spec(w2p), full_spec(b2p),
                  full_spec(sc1), full_spec(sh1)],
        out_specs=(row_spec(Cp), stats_spec(Cp)),
        out_shape=(jax.ShapeDtypeStruct((B, T, Cp), adt),
                   jax.ShapeDtypeStruct((nb, 2, Cp), jnp.float32)),
        scratch_shapes=[pad_scratch(k1, d1)],
        compiler_params=cp_params,
    )(h1, w2p, b2p, sc1, sh1)
    sc2, sh2 = bn_affine(st2)

    # Stage 3: bn2 (reused params, fresh stats) + gelu + conv3 + GLU.
    if fuse_glu:
        out = pl.pallas_call(
            functools.partial(_stage3_fused_kernel, k=k2, dil=d2,
                              approx=approx, half=C2hp),
            grid=(nb,),
            in_specs=[row_spec(Cp), full_spec(w3p), full_spec(b3p),
                      full_spec(sc2), full_spec(sh2)],
            out_specs=row_spec(C2hp),
            out_shape=jax.ShapeDtypeStruct((B, T, C2hp), jnp.float32),
            scratch_shapes=[pad_scratch(k2, d2)],
            compiler_params=cp_params,
        )(h2, w3p, b3p, sc2, sh2)
    else:
        out = pl.pallas_call(
            functools.partial(_stage3_split_kernel, k=k2, dil=d2,
                              approx=approx),
            grid=(nb,),
            in_specs=[row_spec(Cp), full_spec(w3a), full_spec(w3g),
                      full_spec(b3a), full_spec(b3g),
                      full_spec(sc2), full_spec(sh2)],
            out_specs=row_spec(C2hp),
            out_shape=jax.ShapeDtypeStruct((B, T, C2hp), jnp.float32),
            scratch_shapes=[pad_scratch(k2, d2)],
            compiler_params=cp_params,
        )(h2, w3a, w3g, b3a, b3g, sc2, sh2)

    if C2hp != C2h:
        out = out[..., :C2h]
    return out


# --------------------------------------------------------------------------
# Pure-JAX reference (XLA conv + exact gelu) for correctness checking
# --------------------------------------------------------------------------
def _ref_forward(x, params, kernel_sizes, dilation_rates, *,
                 matmul_dtype=jnp.float32, act_dtype=None):
    act_dtype = matmul_dtype if act_dtype is None else act_dtype
    x = x.astype(jnp.float32)
    g2 = params["gamma2"].reshape(1, 1, -1).astype(jnp.float32)
    be2 = params["beta2"].reshape(1, 1, -1).astype(jnp.float32)

    def conv(xin, w, b, dil):
        k = w.shape[0]
        total = dil * (k - 1)
        lo = total // 2
        y = jax.lax.conv_general_dilated(
            xin.astype(matmul_dtype), w.astype(matmul_dtype),
            window_strides=(1,), padding=[(lo, total - lo)],
            rhs_dilation=(dil,), dimension_numbers=('NWC', 'WIO', 'NWC'),
            preferred_element_type=jnp.float32)
        return y + b.reshape(1, 1, -1).astype(jnp.float32)

    def rnd(h):
        # Mirrors the kernel's inter-stage activation storage dtype.
        return h.astype(act_dtype).astype(jnp.float32)

    def bn(h):
        m = jnp.mean(h, axis=(0, 1), keepdims=True)
        v = jnp.mean((h - m) ** 2, axis=(0, 1), keepdims=True)
        return (h - m) / jnp.sqrt(v + _BN_EPS) * g2 + be2

    h = rnd(conv(x, params["w1"], params["b1"], dilation_rates[0]) + x)
    h = jax.nn.gelu(bn(h), approximate=False)
    h = rnd(conv(h, params["w2"], params["b2"], dilation_rates[1]) + h)
    h = jax.nn.gelu(bn(h), approximate=False)
    h3 = conv(h, params["w3"], params["b3"], dilation_rates[2])
    half = h3.shape[-1] // 2
    return h3[..., :half] * jax.nn.sigmoid(h3[..., half:])


# --------------------------------------------------------------------------
# Self-test
# --------------------------------------------------------------------------
if __name__ == "__main__":
    def make_params(key, cin, n_filters, ks):
        keys = jax.random.split(key, 8)

        def init_w(k, ksz, ci, co):
            scale = 1.0 / np.sqrt(ci * ksz)
            # weight layout (k, Cin, Cout) == torch weight (Cout, Cin, k) transposed.
            return jax.random.uniform(k, (ksz, ci, co), jnp.float32, -scale, scale)

        return {
            "w1": init_w(keys[0], ks[0], cin, n_filters[0]),
            "b1": jax.random.uniform(keys[1], (n_filters[0],), jnp.float32, -0.1, 0.1),
            "gamma2": 1.0 + 0.1 * jax.random.normal(keys[2], (n_filters[1],), jnp.float32),
            "beta2": 0.1 * jax.random.normal(keys[3], (n_filters[1],), jnp.float32),
            "w2": init_w(keys[4], ks[1], n_filters[0], n_filters[1]),
            "b2": jax.random.uniform(keys[5], (n_filters[1],), jnp.float32, -0.1, 0.1),
            "w3": init_w(keys[6], ks[2], n_filters[1], n_filters[2]),
            "b3": jax.random.uniform(keys[7], (n_filters[2],), jnp.float32, -0.1, 0.1),
        }

    key = jax.random.PRNGKey(0)
    kp1, kp2, kx1, kx2 = jax.random.split(key, 4)

    B, T = 2, 16
    kernel_sizes = [3, 3, 3]
    dilation_rates = [1, 2, 4]

    # ---- Config A: tiny channels (no lane padding, split-GLU path) ---------
    n_in_A = 8
    nf_A = [8, 8, 16]            # C0 == C1 == Cin forced by residuals / shared bn2
    params_A = make_params(kp1, n_in_A, nf_A, kernel_sizes)
    x_A = jax.random.normal(kx1, (B, T, n_in_A), jnp.float32)

    # Exact f32 mode: matches the PyTorch-equivalent f32 reference tightly.
    out_f32 = jax.block_until_ready(
        conv1d_block_forward(x_A, params_A, kernel_sizes, dilation_rates,
                             matmul_dtype=jnp.float32))
    ref_f32 = _ref_forward(x_A, params_A, kernel_sizes, dilation_rates,
                           matmul_dtype=jnp.float32)
    assert out_f32.shape == (B, T, nf_A[2] // 2)
    np.testing.assert_allclose(np.asarray(out_f32), np.asarray(ref_f32),
                               rtol=1e-4, atol=1e-4)

    # Default perf mode: bf16 MXU operands + bf16 inter-stage activations
    # (f32 accumulation / elementwise math), approx EUP reciprocals; checked
    # against a reference with identically-rounded operands/activations.
    out_bf16 = jax.block_until_ready(
        conv1d_block_forward(x_A, params_A, kernel_sizes, dilation_rates))
    ref_bf16 = _ref_forward(x_A, params_A, kernel_sizes, dilation_rates,
                            matmul_dtype=jnp.bfloat16)
    assert out_bf16.shape == (B, T, nf_A[2] // 2)
    np.testing.assert_allclose(np.asarray(out_bf16), np.asarray(ref_bf16),
                               rtol=2e-2, atol=2e-2)

    # ---- Config B: larger channels (lane padding to 128, fused-GLU path) ---
    n_in_B = 96
    nf_B = [96, 96, 192]
    params_B = make_params(kp2, n_in_B, nf_B, kernel_sizes)
    x_B = jax.random.normal(kx2, (B, T, n_in_B), jnp.float32)

    out_B = jax.block_until_ready(
        conv1d_block_forward(x_B, params_B, kernel_sizes, dilation_rates))
    ref_B = _ref_forward(x_B, params_B, kernel_sizes, dilation_rates,
                         matmul_dtype=jnp.bfloat16)
    assert out_B.shape == (B, T, nf_B[2] // 2)
    np.testing.assert_allclose(np.asarray(out_B), np.asarray(ref_B),
                               rtol=2e-2, atol=2e-2)

    print("KERNEL_OK")
</pallas_src>

<mosaic_0001>
module attributes {stable_mosaic.version = 11 : i64} {
  func.func @_stage1_kernel(%arg0: i32, %arg1: memref<1x16x8xf32, #tpu.memory_space<vmem>>, %arg2: memref<3x8x8xf32, #tpu.memory_space<vmem>>, %arg3: memref<1x8xf32, #tpu.memory_space<vmem>>, %arg4: memref<1x16x8xf32, #tpu.memory_space<vmem>>, %arg5: memref<1x2x8xf32, #tpu.memory_space<vmem>>, %arg6: memref<1x18x8xf32, #tpu.memory_space<vmem>>) attributes {dimension_semantics = [#tpu.dimension_semantics<parallel>], iteration_bounds = array<i64: 2>, scalar_prefetch = 0 : i64, scratch_operands = 1 : i64, tpu.core_type = #tpu.core_type<tc>, window_params = [{transform_indices = @transform_0, window_bounds = array<i64: 1, 16, 8>}, {pipeline_mode = #tpu.pipeline_mode<synchronous>, transform_indices = @transform_1, window_bounds = array<i64: 3, 8, 8>}, {pipeline_mode = #tpu.pipeline_mode<synchronous>, transform_indices = @transform_2, window_bounds = array<i64: 1, 8>}, {transform_indices = @transform_3, window_bounds = array<i64: 1, 16, 8>}, {transform_indices = @transform_4, window_bounds = array<i64: 1, 2, 8>}]} {
    %c0 = arith.constant 0 : index
    %c0_0 = arith.constant 0 : index
    %c0_1 = arith.constant 0 : index
    %0 = vector.load %arg1[%c0, %c0_0, %c0_1] : memref<1x16x8xf32, #tpu.memory_space<vmem>>, vector<1x16x8xf32>
    %cst = arith.constant 0.000000e+00 : f32
    %1 = vector.broadcast %cst : f32 to vector<1x1x8xf32>
    %c0_2 = arith.constant 0 : index
    %c0_3 = arith.constant 0 : index
    %c0_4 = arith.constant 0 : index
    %2 = vector.load %arg6[%c0_2, %c0_3, %c0_4] : memref<1x18x8xf32, #tpu.memory_space<vmem>>, vector<1x1x8xf32>
    tpu.vector_store %arg6[%c0_2, %c0_3, %c0_4], %1 {strides = array<i32>} : memref<1x18x8xf32, #tpu.memory_space<vmem>>, vector<1x1x8xf32>,
    %cst_5 = arith.constant 0.000000e+00 : f32
    %3 = vector.broadcast %cst_5 : f32 to vector<1x1x8xf32>
    %c0_6 = arith.constant 0 : index
    %c17 = arith.constant 17 : index
    %c0_7 = arith.constant 0 : index
    %4 = vector.load %arg6[%c0_6, %c17, %c0_7] : memref<1x18x8xf32, #tpu.memory_space<vmem>>, vector<1x1x8xf32>
    tpu.vector_store %arg6[%c0_6, %c17, %c0_7], %3 {strides = array<i32>} : memref<1x18x8xf32, #tpu.memory_space<vmem>>, vector<1x1x8xf32>,
    %c0_8 = arith.constant 0 : index
    %c1 = arith.constant 1 : index
    %c0_9 = arith.constant 0 : index
    %5 = vector.load %arg6[%c0_8, %c1, %c0_9] : memref<1x18x8xf32, #tpu.memory_space<vmem>>, vector<1x16x8xf32>
    tpu.vector_store %arg6[%c0_8, %c1, %c0_9], %0 {strides = array<i32>} : memref<1x18x8xf32, #tpu.memory_space<vmem>>, vector<1x16x8xf32>,
    %c0_10 = arith.constant 0 : index
    %c0_11 = arith.constant 0 : index
    %c0_12 = arith.constant 0 : index
    %6 = vector.load %arg6[%c0_10, %c0_11, %c0_12] : memref<1x18x8xf32, #tpu.memory_space<vmem>>, vector<1x16x8xf32>
    %7 = vector.shape_cast %6 : vector<1x16x8xf32> to vector<16x8xf32>
    %c0_13 = arith.constant 0 : index
    %c0_14 = arith.constant 0 : index
    %c0_15 = arith.constant 0 : index
    %8 = vector.load %arg2[%c0_13, %c0_14, %c0_15] : memref<3x8x8xf32, #tpu.memory_space<vmem>>, vector<1x8x8xf32>
    %9 = vector.shape_cast %8 : vector<1x8x8xf32> to vector<8x8xf32>
    %cst_16 = arith.constant dense<0.000000e+00> : vector<16x8xf32>
    %10 = tpu.matmul %7, %9, %cst_16 {dimension_numbers = #tpu.dot_dimension_numbers<[1], [0], [0], [1], [0, 0, 1, 1], [], []>} : vector<16x8xf32>, vector<8x8xf32>, vector<16x8xf32> -> vector<16x8xf32>
    %c0_17 = arith.constant 0 : index
    %c1_18 = arith.constant 1 : index
    %c0_19 = arith.constant 0 : index
    %11 = vector.load %arg6[%c0_17, %c1_18, %c0_19] : memref<1x18x8xf32, #tpu.memory_space<vmem>>, vector<1x16x8xf32>
    %12 = vector.shape_cast %11 : vector<1x16x8xf32> to vector<16x8xf32>
    %c1_20 = arith.constant 1 : index
    %c0_21 = arith.constant 0 : index
    %c0_22 = arith.constant 0 : index
    %13 = vector.load %arg2[%c1_20, %c0_21, %c0_22] : memref<3x8x8xf32, #tpu.memory_space<vmem>>, vector<1x8x8xf32>
    %14 = vector.shape_cast %13 : vector<1x8x8xf32> to vector<8x8xf32>
    %cst_23 = arith.constant dense<0.000000e+00> : vector<16x8xf32>
    %15 = tpu.matmul %12, %14, %cst_23 {dimension_numbers = #tpu.dot_dimension_numbers<[1], [0], [0], [1], [0, 0, 1, 1], [], []>} : vector<16x8xf32>, vector<8x8xf32>, vector<16x8xf32> -> vector<16x8xf32>
    %16 = arith.addf %10, %15 : vector<16x8xf32>
    %c0_24 = arith.constant 0 : index
    %c2 = arith.constant 2 : index
    %c0_25 = arith.constant 0 : index
    %17 = vector.load %arg6[%c0_24, %c2, %c0_25] : memref<1x18x8xf32, #tpu.memory_space<vmem>>, vector<1x16x8xf32>
    %18 = vector.shape_cast %17 : vector<1x16x8xf32> to vector<16x8xf32>
    %c2_26 = arith.constant 2 : index
    %c0_27 = arith.constant 0 : index
    %c0_28 = arith.constant 0 : index
    %19 = vector.load %arg2[%c2_26, %c0_27, %c0_28] : memref<3x8x8xf32, #tpu.memory_space<vmem>>, vector<1x8x8xf32>
    %20 = vector.shape_cast %19 : vector<1x8x8xf32> to vector<8x8xf32>
    %cst_29 = arith.constant dense<0.000000e+00> : vector<16x8xf32>
    %21 = tpu.matmul %18, %20, %cst_29 {dimension_numbers = #tpu.dot_dimension_numbers<[1], [0], [0], [1], [0, 0, 1, 1], [], []>} : vector<16x8xf32>, vector<8x8xf32>, vector<16x8xf32> -> vector<16x8xf32>
    %22 = arith.addf %16, %21 : vector<16x8xf32>
    %c0_30 = arith.constant 0 : index
    %c0_31 = arith.constant 0 : index
    %23 = vector.load %arg3[%c0_30, %c0_31] : memref<1x8xf32, #tpu.memory_space<vmem>>, vector<1x8xf32>
    %24 = vector.broadcast %23 : vector<1x8xf32> to vector<16x8xf32>
    %25 = arith.addf %22, %24 : vector<16x8xf32>
    %26 = vector.shape_cast %25 : vector<16x8xf32> to vector<1x16x8xf32>
    %27 = arith.addf %26, %0 : vector<1x16x8xf32>
    %c0_32 = arith.constant 0 : index
    %c0_33 = arith.constant 0 : index
    %c0_34 = arith.constant 0 : index
    %28 = vector.load %arg4[%c0_32, %c0_33, %c0_34] : memref<1x16x8xf32, #tpu.memory_space<vmem>>, vector<1x16x8xf32>
    tpu.vector_store %arg4[%c0_32, %c0_33, %c0_34], %27 {strides = array<i32>} : memref<1x16x8xf32, #tpu.memory_space<vmem>>, vector<1x16x8xf32>,
    %29 = vector.shape_cast %27 : vector<1x16x8xf32> to vector<16x8xf32>
    %cst_35 = arith.constant dense<0.000000e+00> : vector<8xf32>
    %30 = vector.multi_reduction <add>, %29, %cst_35 [0] : vector<16x8xf32> to vector<8xf32>
    %31 = vector.shape_cast %30 : vector<8xf32> to vector<1x8xf32>
    %32 = arith.mulf %29, %29 : vector<16x8xf32>
    %cst_36 = arith.constant dense<0.000000e+00> : vector<8xf32>
    %33 = vector.multi_reduction <add>, %32, %cst_36 [0] : vector<16x8xf32> to vector<8xf32>
    %34 = vector.shape_cast %33 : vector<8xf32> to vector<1x8xf32>
    %35 = tpu.concatenate %31, %34 in 0 : vector<1x8xf32>, vector<1x8xf32> -> vector<2x8xf32>
    %c0_37 = arith.constant 0 : index
    %c0_38 = arith.constant 0 : index
    %c0_39 = arith.constant 0 : index
    %36 = vector.load %arg5[%c0_37, %c0_38, %c0_39] : memref<1x2x8xf32, #tpu.memory_space<vmem>>, vector<1x2x8xf32>
    %37 = vector.shape_cast %36 : vector<1x2x8xf32> to vector<2x8xf32>
    %38 = vector.shape_cast %35 : vector<2x8xf32> to vector<1x2x8xf32>
    tpu.vector_store %arg5[%c0_37, %c0_38, %c0_39], %38 {strides = array<i32>} : memref<1x2x8xf32, #tpu.memory_space<vmem>>, vector<1x2x8xf32>,
    return
  }
  func.func @transform_0(%arg0: i32) -> (i32, i32, i32) {
    %c0_i32 = arith.constant 0 : i32
    %c0_i32_0 = arith.constant 0 : i32
    %c0_i32_1 = arith.constant 0 : i32
    return %arg0, %c0_i32, %c0_i32_0 : i32, i32, i32
  }
  func.func @transform_1(%arg0: i32) -> (i32, i32, i32) {
    %c0_i32 = arith.constant 0 : i32
    %c0_i32_0 = arith.constant 0 : i32
    %c0_i32_1 = arith.constant 0 : i32
    %c0_i32_2 = arith.constant 0 : i32
    return %c0_i32, %c0_i32_0, %c0_i32_1 : i32, i32, i32
  }
  func.func @transform_2(%arg0: i32) -> (i32, i32) {
    %c0_i32 = arith.constant 0 : i32
    %c0_i32_0 = arith.constant 0 : i32
    %c0_i32_1 = arith.constant 0 : i32
    return %c0_i32, %c0_i32_0 : i32, i32
  }
  func.func @transform_3(%arg0: i32) -> (i32, i32, i32) {
    %c0_i32 = arith.constant 0 : i32
    %c0_i32_0 = arith.constant 0 : i32
    %c0_i32_1 = arith.constant 0 : i32
    return %arg0, %c0_i32, %c0_i32_0 : i32, i32, i32
  }
  func.func @transform_4(%arg0: i32) -> (i32, i32, i32) {
    %c0_i32 = arith.constant 0 : i32
    %c0_i32_0 = arith.constant 0 : i32
    %c0_i32_1 = arith.constant 0 : i32
    return %arg0, %c0_i32, %c0_i32_0 : i32, i32, i32
  }
}

</mosaic_0001>

<llo_original>
// kernel: tpu_custom_call.1
$region0: #{tpu_custom_call.1}
  #allocation0 [shape = 'u32[]', space=smem, size = 0x4, offset = 0x4, fixed_abs, tag = 'smem constant byte address 0x4 - core index']
  #allocation1 [shape = 'u32[144,128]{1,0:T(1,128)}', space=vmem, size = 0x12000, scoped, tag = 'internal scratch']
  #allocation2 [shape = 'f32[1,18,8]{2,1,0:T(8,128)}', space=vmem, size = 0x3000, scoped, tag = 'scratch operand']
  %s0 = inlined_call_operand.vmem [shape: f32[2,16,8], index: 0, kind: input, shape index: {}]
  %s1 = inlined_call_operand.vmem [shape: f32[3,8,8], index: 1, kind: input, shape index: {}]
  %s2 = inlined_call_operand.vmem [shape: f32[1,8], index: 2, kind: input, shape index: {}]
  %s3 = inlined_call_operand.vmem [shape: f32[2,16,8], index: 3, kind: output, shape index: {0}]
  %s4 = inlined_call_operand.hbm [shape: f32[2,2,8], index: 4, kind: output, shape index: {1}]
  %5 = xla_tuple %s3, %s4
  %s6 = sld [smem:[#allocation0]]
  $region53: #{tpu_custom_call.1} parent=0
    _
  %s8 = ssub.s32 1, %s6
  %s9 = scalar_select 0, %s8, %s6
  $region1: #{tpu_custom_call.1} parent=0
    #allocation3 [shape = 'u8[2048]{0}', space=vmem, size = 0x800, scoped, tag = 'output window, operand 1']
    #allocation4 [shape = 's32[2]{0}', space=sflag, size = 0x8, scoped, tag = 'scoped memory for tpu_custom_call.1']
    %10 = vsyncpa [#allocation4], 0
    %s11 = scalar_lea.sflag [#allocation4], 1
    %12 = vsyncpa %s11, 0
    loop: start=0, step=1, limit=4
    $region2: #{tpu_custom_call.1} parent=1 // loop_pre_header
      _
    $region3: #{tpu_custom_call.1} parent=1 // loop_header
      %s14 = sphi 0, %s18
      %p15 = scmp.ge.s32.totalorder %s14, 4
      %s24 = sphi 0, %s26
      %s27 = sphi 0, %s24
      %s28 = sphi 0, %s27
      %s44 = sphi 0, %s28
      %s48 = sphi 0, %s48
      %s50 = sphi 0, %s48
      %s51 = sphi 0, %s50
      %s65 = sphi 0, %s51
      %s69 = sphi 0, %s69
      %s71 = sphi 0, %s69
      %s72 = sphi 0, %s71
      %s86 = sphi 0, %s72
      %s92 = sphi 0, %s94
      %s95 = sphi 0, %s92
      %s96 = sphi 0, %s95
      %s112 = sphi 0, %s96
      %s118 = sphi 0, %s120
      %s121 = sphi 0, %s118
      %s122 = sphi 0, %s121
      %s138 = sphi 0, %s122
    $region4: #{tpu_custom_call.1} parent=1 // loop_header_branch
      %17 = sbr.rel (%p15) target = $region8
    $region5: #{tpu_custom_call.1} parent=1 // loop_body
      %s19 = ssub.s32 %s14, 1
      %s20 = ssub.s32 %s14, 2
      %s21 = sadd.s32 %s14, 1
      %s22 = ssub.s32 %s14, %s21
      %p23 = scmp.eq.s32.totalorder %s22, 0
      %s25 = sadd.s32 %s24, 1
      %s26 = scalar_select %p23, %s24, %s25
      %p29 = pneg %p23
      %p30 = scmp.eq.s32.totalorder %s14, 1
      %p31 = por %p29, %p30
      %p32 = scmp.ne.s32.totalorder %s24, %s27
      %p33 = scmp.eq.s32.totalorder %s14, 0
      %p34 = por %p32, %p33
      %p35 = scmp.ne.s32.totalorder %s24, %s27
      %p36 = scmp.eq.s32.totalorder %s19, 1
      %p37 = por %p35, %p36
      %p38 = scmp.ne.s32.totalorder %s27, %s28
      %p39 = scmp.eq.s32.totalorder %s19, 0
      %p40 = por %p38, %p39
      %p41 = scmp.ne.s32.totalorder %s27, %s28
      %p42 = scmp.eq.s32.totalorder %s20, 1
      %p43 = por %p41, %p42
      %p45 = scmp.ne.s32.totalorder %s28, %s44
      %p46 = scmp.eq.s32.totalorder %s20, 0
      %p47 = por %p45, %p46
      %s49 = sadd.s32 %s48, 1
      %p52 = scmp.eq.s32.totalorder %s14, 1
      %p53 = scmp.ne.s32.totalorder %s48, %s50
      %p54 = scmp.eq.s32.totalorder %s14, 0
      %p55 = por %p53, %p54
      %p56 = scmp.ne.s32.totalorder %s48, %s50
      %p57 = scmp.eq.s32.totalorder %s19, 1
      %p58 = por %p56, %p57
      %p59 = scmp.ne.s32.totalorder %s50, %s51
      %p60 = scmp.eq.s32.totalorder %s19, 0
      %p61 = por %p59, %p60
      %p62 = scmp.ne.s32.totalorder %s50, %s51
      %p63 = scmp.eq.s32.totalorder %s20, 1
      %p64 = por %p62, %p63
      %p66 = scmp.ne.s32.totalorder %s51, %s65
      %p67 = scmp.eq.s32.totalorder %s20, 0
      %p68 = por %p66, %p67
      %s70 = sadd.s32 %s69, 1
      %p73 = scmp.eq.s32.totalorder %s14, 1
      %p74 = scmp.ne.s32.totalorder %s69, %s71
      %p75 = scmp.eq.s32.totalorder %s14, 0
      %p76 = por %p74, %p75
      %p77 = scmp.ne.s32.totalorder %s69, %s71
      %p78 = scmp.eq.s32.totalorder %s19, 1
      %p79 = por %p77, %p78
      %p80 = scmp.ne.s32.totalorder %s71, %s72
      %p81 = scmp.eq.s32.totalorder %s19, 0
      %p82 = por %p80, %p81
      %p83 = scmp.ne.s32.totalorder %s71, %s72
      %p84 = scmp.eq.s32.totalorder %s20, 1
      %p85 = por %p83, %p84
      %p87 = scmp.ne.s32.totalorder %s72, %s86
      %p88 = scmp.eq.s32.totalorder %s20, 0
      %p89 = por %p87, %p88
      %s90 = ssub.s32 %s14, %s21
      %p91 = scmp.eq.s32.totalorder %s90, 0
      %s93 = sadd.s32 %s92, 1
      %s94 = scalar_select %p91, %s92, %s93
      %p97 = pneg %p91
      %p98 = scmp.eq.s32.totalorder %s14, 1
      %p99 = por %p97, %p98
      %p100 = scmp.ne.s32.totalorder %s92, %s95
      %p101 = scmp.eq.s32.totalorder %s14, 0
      %p102 = por %p100, %p101
      %p103 = scmp.ne.s32.totalorder %s92, %s95
      %p104 = scmp.eq.s32.totalorder %s19, 1
      %p105 = por %p103, %p104
      %p106 = scmp.ne.s32.totalorder %s95, %s96
      %p107 = scmp.eq.s32.totalorder %s19, 0
      %p108 = por %p106, %p107
      %p109 = scmp.ne.s32.totalorder %s95, %s96
      %p110 = scmp.eq.s32.totalorder %s20, 1
      %p111 = por %p109, %p110
      %p113 = scmp.ne.s32.totalorder %s96, %s112
      %p114 = scmp.eq.s32.totalorder %s20, 0
      %p115 = por %p113, %p114
      %s116 = ssub.s32 %s14, %s21
      %p117 = scmp.eq.s32.totalorder %s116, 0
      %s119 = sadd.s32 %s118, 1
      %s120 = scalar_select %p117, %s118, %s119
      %p123 = pneg %p117
      %p124 = scmp.eq.s32.totalorder %s14, 1
      %p125 = por %p123, %p124
      %p126 = scmp.ne.s32.totalorder %s118, %s121
      %p127 = scmp.eq.s32.totalorder %s14, 0
      %p128 = por %p126, %p127
      %p129 = scmp.ne.s32.totalorder %s118, %s121
      %p130 = scmp.eq.s32.totalorder %s19, 1
      %p131 = por %p129, %p130
      %p132 = scmp.ne.s32.totalorder %s121, %s122
      %p133 = scmp.eq.s32.totalorder %s19, 0
      %p134 = por %p132, %p133
      %p135 = scmp.ne.s32.totalorder %s121, %s122
      %p136 = scmp.eq.s32.totalorder %s20, 1
      %p137 = por %p135, %p136
      %p139 = scmp.ne.s32.totalorder %s122, %s138
      %p140 = scmp.eq.s32.totalorder %s20, 0
      %p141 = por %p139, %p140
      %p142 = scmp.le.s32.totalorder 1, %s14
      %p143 = scmp.lt.s32.totalorder %s14, 3
      %p144 = pnand %p142, %p143
      %p145 = pneg %p144
      // Predicated region
      $region9: #{tpu_custom_call.1} parent=5 // pred_check
        _
      $region10: #{tpu_custom_call.1} parent=5 // pred_check_branch
        %147 = sbr.rel (%p144) target = $region12
      $region11: #{tpu_custom_call.1} parent=5 // pred_region
        %s148 = ssub.s32 %s14, 1
        // Predicated region
        $region13: #{tpu_custom_call.1} parent=11 // pred_check
          %p149 = pneg %p61
        $region14: #{tpu_custom_call.1} parent=11 // pred_check_branch
          %151 = sbr.rel (%p149) target = $region16
        $region15: #{tpu_custom_call.1} parent=11 // pred_region
          _
        $region16: #{tpu_custom_call.1} parent=11 // pred_fallthru
          _
        // Predicated region
        $region17: #{tpu_custom_call.1} parent=11 // pred_check
          %p152 = pneg %p82
        $region18: #{tpu_custom_call.1} parent=11 // pred_check_branch
          %154 = sbr.rel (%p152) target = $region20
        $region19: #{tpu_custom_call.1} parent=11 // pred_region
          _
        $region20: #{tpu_custom_call.1} parent=11 // pred_fallthru
          _
      $region12: #{tpu_custom_call.1} parent=5 // pred_fallthru
        _
      %p155 = scmp.lt.s32.totalorder %s14, 2
      // Predicated region
      $region21: #{tpu_custom_call.1} parent=5 // pred_check
        %p156 = pneg %p155
      $region22: #{tpu_custom_call.1} parent=5 // pred_check_branch
        %158 = sbr.rel (%p156) target = $region24
      $region23: #{tpu_custom_call.1} parent=5 // pred_region
        // Predicated region
        $region25: #{tpu_custom_call.1} parent=23 // pred_check
          %p159 = pneg %p34
        $region26: #{tpu_custom_call.1} parent=23 // pred_check_branch
          %161 = sbr.rel (%p159) target = $region28
        $region27: #{tpu_custom_call.1} parent=23 // pred_region
          %p162 = scmp.lt.s32.totalorder %s14, 1
          %s163 = scalar_select %p162, %s14, 1
          %s164 = smul.addr %s163, 2
          %s165 = smul.addr %s164, 8
          %s166 = scalar_lea.vmem %s0, %s165
        $region28: #{tpu_custom_call.1} parent=23 // pred_fallthru
          _
      $region24: #{tpu_custom_call.1} parent=5 // pred_fallthru
        _
      %p167 = scmp.le.s32.totalorder 1, %s14
      %p168 = scmp.lt.s32.totalorder %s14, 3
      %p169 = pnand %p167, %p168
      %p170 = pneg %p169
      // Predicated region
      $region29: #{tpu_custom_call.1} parent=5 // pred_check
        _
      $region30: #{tpu_custom_call.1} parent=5 // pred_check_branch
        %172 = sbr.rel (%p169) target = $region32
      $region31: #{tpu_custom_call.1} parent=5 // pred_region
        %s173 = ssub.s32 %s14, 1
        %p174 = scmp.lt.s32.totalorder %s19, 1
        %s175 = scalar_select %p174, %s19, 1
        %s176 = smul.addr %s175, 2
        %s177 = smul.addr %s176, 8
        %s178 = scalar_lea.vmem %s0, %s177
        %p179 = pneg %p40
        %p180 = pneg %p37
        %p181 = pneg %p61
        %p182 = pneg %p58
        %p183 = pneg %p82
        %p184 = pneg %p79
        %p185 = pneg %p108
        %p186 = pneg %p105
        %p187 = scmp.lt.s32.totalorder %s19, 1
        %s188 = scalar_select %p187, %s19, 1
        %s189 = smul.addr %s188, 2
        %s190 = smul.addr %s189, 8
        %s191 = scalar_lea.vmem %s3, %s190
        %p192 = pneg %p134
        %p193 = pneg %p131
        %s194 = sand.u32 %s121, 1
        %s195 = scalar_lea.sflag [#allocation4], %s194
        %s196 = sand.u32 %s121, 1
        %s197 = smul.addr %s196, 2
        %s198 = scalar_lea.vmem [#allocation3], %s197
        %p199 = scmp.lt.s32.totalorder %s19, 1
        %s200 = scalar_select %p199, %s19, 1
        %s201 = smul.addr %s200, 2
        %s202 = smul.addr %s201, 8
        %s203 = scalar_lea.vmem %s0, %s202
        %p204 = scmp.lt.s32.totalorder %s19, 1
        %s205 = scalar_select %p204, %s19, 1
        %s206 = smul.addr %s205, 2
        %s207 = smul.addr %s206, 8
        %s208 = scalar_lea.vmem %s3, %s207
        %v209 = vld [vmem:[%s203] sm:$0xff]
        %v210 = vld [vmem:[%s203 + $0x8] sm:$0xff]
        %vm211 = vcmask 57344
        %212 = vst.msk [vmem:[#allocation2] sm:$0x1] %vm211, 0.0
        %213 = vst.msk [vmem:[#allocation2 + $0x11] sm:$0x1] %vm211, 0.0
        %vm214 = vcmask 64512
        %215 = vst.msk [vmem:[#allocation2 + $0x1] sm:$0xff] %vm214, %v209
        %216 = vst.msk [vmem:[#allocation2 + $0x9] sm:$0xff] %vm214, %v210
        %v217 = vld [vmem:[#allocation2] sm:$0xff]
        %v218 = vld [vmem:[#allocation2 + $0x8] sm:$0xff]
        %v219 = vld [vmem:[%s1] sm:$0xff]
        %v220 = vld [vmem:[#allocation2 + $0x1] sm:$0xff]
        %v221 = vld [vmem:[#allocation2 + $0x9] sm:$0xff]
        %s222 = scalar_lea.vmem %s1, 8
        %v223 = vld [vmem:[%s222] sm:$0xff]
        %v225 = vsel %vm214, %v220, 0
        %v228 = vsel %vm214, %v221, 0
        %230 = vmatprep.subr.mxu0 0.0
        %231 = vmatpush1.msra.mxu0 %v223
        %232 = vmatprep.subr.mxu0 0.0
        %233 = vmatpush1.msra.mxu0 0.0
        %234 = vmatprep.subr.mxu0 0.0
        %235 = vmatpush1.msra.mxu0 0.0
        %236 = vmatprep.subr.mxu0 0.0
        %237 = vmatpush1.msra.mxu0 0.0
        %238 = vmatprep.subr.mxu0 0.0
        %239 = vmatpush1.msra.mxu0 0.0
        %240 = vmatprep.subr.mxu0 0.0
        %241 = vmatpush1.msra.mxu0 0.0
        %242 = vmatprep.subr.mxu0 0.0
        %243 = vmatpush1.msra.mxu0 0.0
        %244 = vmatprep.subr.mxu0 0.0
        %245 = vmatpush1.msra.mxu0 0.0
        %246 = vmatprep.subr.mxu0 0.0
        %247 = vmatpush1.msra.mxu0 0.0
        %248 = vmatprep.subr.mxu0 0.0
        %249 = vmatpush1.msra.mxu0 0.0
        %250 = vmatprep.subr.mxu0 0.0
        %251 = vmatpush1.msra.mxu0 0.0
        %252 = vmatprep.subr.mxu0 0.0
        %253 = vmatpush1.msra.mxu0 0.0
        %254 = vmatprep.subr.mxu0 0.0
        %255 = vmatpush1.msra.mxu0 0.0
        %256 = vmatprep.subr.mxu0 0.0
        %257 = vmatpush1.msra.mxu0 0.0
        %258 = vmatprep.subr.mxu0 0.0
        %259 = vmatpush1.msra.mxu0 0.0
        %260 = vmatprep.subr.mxu0 0.0
        %261 = vmatpush1.msra.mxu0 0.0
        %262 = vmatprep.subr.mxu0 0.0
        %263 = vmatpush1.msra.mxu0 0.0
        %264 = vmatprep.subr.mxu0 0.0
        %265 = vmatpush1.msra.mxu0 0.0
        %266 = vmatprep.subr.mxu0 0.0
        %267 = vmatpush1.msra.mxu0 0.0
        %268 = vmatprep.subr.mxu0 0.0
        %269 = vmatpush1.msra.mxu0 0.0
        %270 = vmatprep.subr.mxu0 0.0
        %271 = vmatpush1.msra.mxu0 0.0
        %272 = vmatprep.subr.mxu0 0.0
        %273 = vmatpush1.msra.mxu0 0.0
        %274 = vmatprep.subr.mxu0 0.0
        %275 = vmatpush1.msra.mxu0 0.0
        %276 = vmatprep.subr.mxu0 0.0
        %277 = vmatpush1.msra.mxu0 0.0
        %278 = vmatprep.subr.mxu0 0.0
        %279 = vmatpush1.msra.mxu0 0.0
        %280 = vmatprep.subr.mxu0 0.0
        %281 = vmatpush1.msra.mxu0 0.0
        %282 = vmatprep.subr.mxu0 0.0
        %283 = vmatpush1.msra.mxu0 0.0
        %284 = vmatprep.subr.mxu0 0.0
        %285 = vmatpush1.msra.mxu0 0.0
        %286 = vmatprep.subr.mxu0 0.0
        %287 = vmatpush1.msra.mxu0 0.0
        %288 = vmatprep.subr.mxu0 0.0
        %289 = vmatpush1.msra.mxu0 0.0
        %290 = vmatprep.subr.mxu0 0.0
        %291 = vmatpush1.msra.mxu0 0.0
        %292 = vmatprep.subr.mxu0 0.0
        %293 = vmatpush1.msra.mxu0 0.0
        %294 = vmatprep.mubr.f32.mxu0 0.0
        %295 = vmatmul.mubr.f32.gmra.mrb[0].mxu0 %v225
        %v296 = vpop.f32.mrb[0].mxu0
        %v297 = vadd.f32 0.0, %v296
        %v298 = vpop.f32.mrb[0].mxu0
        %299 = vmatprep.mubr.f32.mxu0 0.0
        %300 = vmatmul.mubr.f32.gmra.mrb[0].mxu0 %v228
        %v301 = vpop.f32.mrb[0].mxu0
        %v302 = vadd.f32 0.0, %v301
        %v303 = vpop.f32.mrb[0].mxu0
        %304 = vdwg.mxu0
        %v306 = vsel %vm214, %v217, 0
        %v309 = vsel %vm214, %v218, 0
        %311 = vmatprep.subr.mxu0 0.0
        %312 = vmatpush1.msra.mxu0 %v219
        %313 = vmatprep.subr.mxu0 0.0
        %314 = vmatpush1.msra.mxu0 0.0
        %315 = vmatprep.subr.mxu0 0.0
        %316 = vmatpush1.msra.mxu0 0.0
        %317 = vmatprep.subr.mxu0 0.0
        %318 = vmatpush1.msra.mxu0 0.0
        %319 = vmatprep.subr.mxu0 0.0
        %320 = vmatpush1.msra.mxu0 0.0
        %321 = vmatprep.subr.mxu0 0.0
        %322 = vmatpush1.msra.mxu0 0.0
        %323 = vmatprep.subr.mxu0 0.0
        %324 = vmatpush1.msra.mxu0 0.0
        %325 = vmatprep.subr.mxu0 0.0
        %326 = vmatpush1.msra.mxu0 0.0
        %327 = vmatprep.subr.mxu0 0.0
        %328 = vmatpush1.msra.mxu0 0.0
        %329 = vmatprep.subr.mxu0 0.0
        %330 = vmatpush1.msra.mxu0 0.0
        %331 = vmatprep.subr.mxu0 0.0
        %332 = vmatpush1.msra.mxu0 0.0
        %333 = vmatprep.subr.mxu0 0.0
        %334 = vmatpush1.msra.mxu0 0.0
        %335 = vmatprep.subr.mxu0 0.0
        %336 = vmatpush1.msra.mxu0 0.0
        %337 = vmatprep.subr.mxu0 0.0
        %338 = vmatpush1.msra.mxu0 0.0
        %339 = vmatprep.subr.mxu0 0.0
        %340 = vmatpush1.msra.mxu0 0.0
        %341 = vmatprep.subr.mxu0 0.0
        %342 = vmatpush1.msra.mxu0 0.0
        %343 = vmatprep.subr.mxu0 0.0
        %344 = vmatpush1.msra.mxu0 0.0
        %345 = vmatprep.subr.mxu0 0.0
        %346 = vmatpush1.msra.mxu0 0.0
        %347 = vmatprep.subr.mxu0 0.0
        %348 = vmatpush1.msra.mxu0 0.0
        %349 = vmatprep.subr.mxu0 0.0
        %350 = vmatpush1.msra.mxu0 0.0
        %351 = vmatprep.subr.mxu0 0.0
        %352 = vmatpush1.msra.mxu0 0.0
        %353 = vmatprep.subr.mxu0 0.0
        %354 = vmatpush1.msra.mxu0 0.0
        %355 = vmatprep.subr.mxu0 0.0
        %356 = vmatpush1.msra.mxu0 0.0
        %357 = vmatprep.subr.mxu0 0.0
        %358 = vmatpush1.msra.mxu0 0.0
        %359 = vmatprep.subr.mxu0 0.0
        %360 = vmatpush1.msra.mxu0 0.0
        %361 = vmatprep.subr.mxu0 0.0
        %362 = vmatpush1.msra.mxu0 0.0
        %363 = vmatprep.subr.mxu0 0.0
        %364 = vmatpush1.msra.mxu0 0.0
        %365 = vmatprep.subr.mxu0 0.0
        %366 = vmatpush1.msra.mxu0 0.0
        %367 = vmatprep.subr.mxu0 0.0
        %368 = vmatpush1.msra.mxu0 0.0
        %369 = vmatprep.subr.mxu0 0.0
        %370 = vmatpush1.msra.mxu0 0.0
        %371 = vmatprep.subr.mxu0 0.0
        %372 = vmatpush1.msra.mxu0 0.0
        %373 = vmatprep.subr.mxu0 0.0
        %374 = vmatpush1.msra.mxu0 0.0
        %375 = vmatprep.mubr.f32.mxu0 0.0
        %376 = vmatmul.mubr.f32.gmra.mrb[0].mxu0 %v306
        %v377 = vpop.f32.mrb[0].mxu0
        %v378 = vadd.f32 %v297, %v377
        %v379 = vpop.f32.mrb[0].mxu0
        %380 = vmatprep.mubr.f32.mxu0 0.0
        %381 = vmatmul.mubr.f32.gmra.mrb[0].mxu0 %v309
        %v382 = vpop.f32.mrb[0].mxu0
        %v383 = vadd.f32 %v302, %v382
        %v384 = vpop.f32.mrb[0].mxu0
        %385 = vdwg.mxu0
        %v386 = vld [vmem:[#allocation2 + $0x2] sm:$0xff]
        %v387 = vld [vmem:[#allocation2 + $0xa] sm:$0xff]
        %s388 = scalar_lea.vmem %s1, 16
        %v389 = vld [vmem:[%s388] sm:$0xff]
        %v391 = vsel %vm214, %v386, 0
        %v394 = vsel %vm214, %v387, 0
        %396 = vmatprep.subr.mxu0 0.0
        %397 = vmatpush1.msra.mxu0 %v389
        %398 = vmatprep.subr.mxu0 0.0
        %399 = vmatpush1.msra.mxu0 0.0
        %400 = vmatprep.subr.mxu0 0.0
        %401 = vmatpush1.msra.mxu0 0.0
        %402 = vmatprep.subr.mxu0 0.0
        %403 = vmatpush1.msra.mxu0 0.0
        %404 = vmatprep.subr.mxu0 0.0
        %405 = vmatpush1.msra.mxu0 0.0
        %406 = vmatprep.subr.mxu0 0.0
        %407 = vmatpush1.msra.mxu0 0.0
        %408 = vmatprep.subr.mxu0 0.0
        %409 = vmatpush1.msra.mxu0 0.0
        %410 = vmatprep.subr.mxu0 0.0
        %411 = vmatpush1.msra.mxu0 0.0
        %412 = vmatprep.subr.mxu0 0.0
        %413 = vmatpush1.msra.mxu0 0.0
        %414 = vmatprep.subr.mxu0 0.0
        %415 = vmatpush1.msra.mxu0 0.0
        %416 = vmatprep.subr.mxu0 0.0
        %417 = vmatpush1.msra.mxu0 0.0
        %418 = vmatprep.subr.mxu0 0.0
        %419 = vmatpush1.msra.mxu0 0.0
        %420 = vmatprep.subr.mxu0 0.0
        %421 = vmatpush1.msra.mxu0 0.0
        %422 = vmatprep.subr.mxu0 0.0
        %423 = vmatpush1.msra.mxu0 0.0
        %424 = vmatprep.subr.mxu0 0.0
        %425 = vmatpush1.msra.mxu0 0.0
        %426 = vmatprep.subr.mxu0 0.0
        %427 = vmatpush1.msra.mxu0 0.0
        %428 = vmatprep.subr.mxu0 0.0
        %429 = vmatpush1.msra.mxu0 0.0
        %430 = vmatprep.subr.mxu0 0.0
        %431 = vmatpush1.msra.mxu0 0.0
        %432 = vmatprep.subr.mxu0 0.0
        %433 = vmatpush1.msra.mxu0 0.0
        %434 = vmatprep.subr.mxu0 0.0
        %435 = vmatpush1.msra.mxu0 0.0
        %436 = vmatprep.subr.mxu0 0.0
        %437 = vmatpush1.msra.mxu0 0.0
        %438 = vmatprep.subr.mxu0 0.0
        %439 = vmatpush1.msra.mxu0 0.0
        %440 = vmatprep.subr.mxu0 0.0
        %441 = vmatpush1.msra.mxu0 0.0
        %442 = vmatprep.subr.mxu0 0.0
        %443 = vmatpush1.msra.mxu0 0.0
        %444 = vmatprep.subr.mxu0 0.0
        %445 = vmatpush1.msra.mxu0 0.0
        %446 = vmatprep.subr.mxu0 0.0
        %447 = vmatpush1.msra.mxu0 0.0
        %448 = vmatprep.subr.mxu0 0.0
        %449 = vmatpush1.msra.mxu0 0.0
        %450 = vmatprep.subr.mxu0 0.0
        %451 = vmatpush1.msra.mxu0 0.0
        %452 = vmatprep.subr.mxu0 0.0
        %453 = vmatpush1.msra.mxu0 0.0
        %454 = vmatprep.subr.mxu0 0.0
        %455 = vmatpush1.msra.mxu0 0.0
        %456 = vmatprep.subr.mxu0 0.0
        %457 = vmatpush1.msra.mxu0 0.0
        %458 = vmatprep.subr.mxu0 0.0
        %459 = vmatpush1.msra.mxu0 0.0
        %460 = vmatprep.mubr.f32.mxu0 0.0
        %461 = vmatmul.mubr.f32.gmra.mrb[0].mxu0 %v391
        %v462 = vpop.f32.mrb[0].mxu0
        %v463 = vadd.f32 0.0, %v462
        %v464 = vpop.f32.mrb[0].mxu0
        %465 = vmatprep.mubr.f32.mxu0 0.0
        %466 = vmatmul.mubr.f32.gmra.mrb[0].mxu0 %v394
        %v467 = vpop.f32.mrb[0].mxu0
        %v468 = vadd.f32 0.0, %v467
        %v469 = vpop.f32.mrb[0].mxu0
        %470 = vdwg.mxu0
        %v471 = vadd.f32 %v378, %v463
        %v472 = vadd.f32 %v383, %v468
        %v473 = vld [vmem:[%s2] sm:$0x1]
        %v475 = vlaneseq
        %v476 = vshrl.u32 %v475, 7
        %v477 = vsub.s32 0, %v476
        %v478 = vrot.slane %v473, %v477
        %v480 = vadd.f32 %v471, %v478
        %v481 = vadd.f32 %v472, %v478
        %v482 = vadd.f32 %v480, %v209
        %v483 = vadd.f32 %v481, %v210
        %484 = vst.msk [vmem:[%s208] sm:$0xff] %vm214, %v482
        %485 = vst.msk [vmem:[%s208 + $0x8] sm:$0xff] %vm214, %v483
        %v486 = vsel %vm214, %v482, 0.0
        %v487 = vsel %vm214, %v483, 0.0
        %v488 = vadd.f32 %v486, %v487
        %v489 = vrot.slane %v488, 4
        %v490 = vadd.f32 %v488, %v489
        %v491 = vrot.slane %v490, 2
        %v492 = vadd.f32 %v490, %v491
        %v493 = vrot.slane %v492, 1
        %v494 = vadd.f32 %v492, %v493
        %v495 = vmul.f32 %v482, %v482
        %v496 = vmul.f32 %v483, %v483
        %v497 = vsel %vm214, %v495, 0.0
        %v498 = vsel %vm214, %v496, 0.0
        %v499 = vadd.f32 %v497, %v498
        %v500 = vrot.slane %v499, 4
        %v501 = vadd.f32 %v499, %v500
        %v502 = vrot.slane %v501, 2
        %v503 = vadd.f32 %v501, %v502
        %v504 = vrot.slane %v503, 1
        %v505 = vadd.f32 %v503, %v504
        %vm506 = vcmask 1040384
        %v507 = vsel %vm506, %v494, %v505
        %vm508 = vcmask 58368
        %509 = vst.msk [vmem:[%s198] sm:$0x3] %vm508, %v507
        %p510 = scmp.lt.s32.totalorder %s19, 1
        %s511 = scalar_select %p510, %s19, 1
        %s512 = smul.addr %s511, 2
        %s513 = smul.addr %s512, 8
        %s514 = scalar_lea.vmem %s3, %s513
        %s515 = sand.u32 %s121, 1
        %s516 = scalar_lea.sflag [#allocation4], %s515
        %s517 = sand.u32 %s121, 1
        %s518 = smul.addr %s517, 2
        %s519 = scalar_lea.vmem [#allocation3], %s518
        // Predicated region
        $region33: #{tpu_custom_call.1} parent=31 // pred_check
          %p520 = pneg %p105
        $region34: #{tpu_custom_call.1} parent=31 // pred_check_branch
          %522 = sbr.rel (%p520) target = $region36
        $region35: #{tpu_custom_call.1} parent=31 // pred_region
          _
        $region36: #{tpu_custom_call.1} parent=31 // pred_fallthru
          _
        // Predicated region
        $region37: #{tpu_custom_call.1} parent=31 // pred_check
          %p523 = pneg %p131
        $region38: #{tpu_custom_call.1} parent=31 // pred_check_branch
          %525 = sbr.rel (%p523) target = $region40
        $region39: #{tpu_custom_call.1} parent=31 // pred_region
          %s527 = ssub.s32 32, 32
          %528 = vsyncadd %s516, %s527
          %s529 = smul.addr %s19, 32
          %s530 = scalar_lea.hbm %s4, %s529
          %s532 = sshll.u32 %s519, 4
          %s533 = int_to_ptr.vmem [resolvable:$true] %s532
          %535 = dma.vmem_to_hbm [thread:$0]  %s533, 32, %s530, %s516
        $region40: #{tpu_custom_call.1} parent=31 // pred_fallthru
          _
      $region32: #{tpu_custom_call.1} parent=5 // pred_fallthru
        _
      %p536 = scmp.le.s32.totalorder 2, %s14
      // Predicated region
      $region41: #{tpu_custom_call.1} parent=5 // pred_check
        %p537 = pneg %p536
      $region42: #{tpu_custom_call.1} parent=5 // pred_check_branch
        %539 = sbr.rel (%p537) target = $region44
      $region43: #{tpu_custom_call.1} parent=5 // pred_region
        %s540 = ssub.s32 %s14, 2
        // Predicated region
        $region45: #{tpu_custom_call.1} parent=43 // pred_check
          %p541 = pneg %p111
        $region46: #{tpu_custom_call.1} parent=43 // pred_check_branch
          %543 = sbr.rel (%p541) target = $region48
        $region47: #{tpu_custom_call.1} parent=43 // pred_region
          %p544 = scmp.lt.s32.totalorder %s20, 1
          %s545 = scalar_select %p544, %s20, 1
          %s546 = smul.addr %s545, 2
          %s547 = smul.addr %s546, 8
          %s548 = scalar_lea.vmem %s3, %s547
        $region48: #{tpu_custom_call.1} parent=43 // pred_fallthru
          _
        // Predicated region
        $region49: #{tpu_custom_call.1} parent=43 // pred_check
          %p549 = pneg %p137
        $region50: #{tpu_custom_call.1} parent=43 // pred_check_branch
          %551 = sbr.rel (%p549) target = $region52
        $region51: #{tpu_custom_call.1} parent=43 // pred_region
          %s552 = sand.u32 %s122, 1
          %s553 = scalar_lea.sflag [#allocation4], %s552
          %s554 = sand.u32 %s122, 1
          %s555 = smul.addr %s554, 2
          %s556 = scalar_lea.vmem [#allocation3], %s555
          %557 = dma.done %s553, 32
        $region52: #{tpu_custom_call.1} parent=43 // pred_fallthru
          _
      $region44: #{tpu_custom_call.1} parent=5 // pred_fallthru
        _
    $region6: #{tpu_custom_call.1} parent=1 // loop_footer
      %s18 = sadd.s32 1, %s14
    $region7: #{tpu_custom_call.1} parent=1 // loop_footer_branch
      %13 = sbr.rel target = $region3
    $region8: #{tpu_custom_call.1} parent=1 // loop_exit
      _
    %558 = vsyncpa [#allocation4], 1
    %s559 = scalar_lea.sflag [#allocation4], 1
    %560 = vsyncpa %s559, 1

</llo_original>
